<compile_context>
chip_gen: v7x
topology: tpu7x:2x2x1
jax: 0.10.0
libtpu: 0.0.40
codegen_flags: <defaults>
</compile_context>

<pallas_src>
import functools

import jax
import jax.numpy as jnp
from jax.experimental import pallas as pl
from jax.experimental.pallas import tpu as pltpu


# ----------------------------------------------------------------------------- helpers

def _mosaic_params(dimension_semantics, *block_bytes):
    """CompilerParams with a VMEM limit sized to double-buffered blocks (v5e/v6e feedback)."""
    need = 2 * int(sum(block_bytes)) + (2 << 20)
    limit = max(32 << 20, min(need, 64 << 20))
    return pltpu.CompilerParams(
        dimension_semantics=dimension_semantics,
        vmem_limit_bytes=limit,
    )


def _pick_tile_t(C, T, itemsize, max_single_block=8 << 20, max_tile=4 << 20):
    """None -> whole (C, T) slab per batch; otherwise a 128-multiple T tile that divides T."""
    if C * T * itemsize <= max_single_block or T % 128 != 0:
        return None
    for m in range(T // 128, 0, -1):
        t = 128 * m
        if T % t == 0 and C * t * itemsize <= max_tile:
            return t
    return 128


# ----------------------------------------------------------------------------- gLN kernels

def _gln_fused_kernel(x_ref, w_ref, b_ref, o_ref, *, eps, inv_n):
    # x_ref: (C, T)  (batch dim squeezed out by the BlockSpec); w_ref/b_ref: (C, 1).
    x = x_ref[...]
    xf = x.astype(jnp.float32)                 # stats accumulate in f32
    s = jnp.sum(xf)
    ss = jnp.sum(xf * xf)
    mean = s * inv_n
    var = ss * inv_n - mean * mean
    inv_std = jax.lax.rsqrt(var + eps)
    scale = w_ref[...].astype(jnp.float32) * inv_std          # (C, 1)  — O(C) fold
    shift = b_ref[...].astype(jnp.float32) - mean * scale     # (C, 1)
    # Elementwise pass stays in the input dtype (bf16-native on v6e/v7x).
    y = x * scale.astype(x.dtype) + shift.astype(x.dtype)
    o_ref[...] = y.astype(o_ref.dtype)


def _gln_stats_kernel(x_ref, s_ref, ss_ref):
    # Reduction pass: accumulate per-batch sum and sum-of-squares over T tiles.
    @pl.when(pl.program_id(1) == 0)
    def _init():
        s_ref[...] = jnp.zeros_like(s_ref)
        ss_ref[...] = jnp.zeros_like(ss_ref)

    xf = x_ref[...].astype(jnp.float32)
    s_ref[...] = s_ref[...] + jnp.sum(xf)
    ss_ref[...] = ss_ref[...] + jnp.sum(xf * xf)


def _gln_apply_kernel(x_ref, scale_ref, shift_ref, o_ref):
    # Normalize pass: y = x * scale + shift with per-batch (C, 1) scale/shift.
    x = x_ref[...]
    o_ref[...] = (x * scale_ref[...] + shift_ref[...]).astype(o_ref.dtype)


def global_layer_norm(x, weight, bias, eps=1e-5, tile_t=None):
    """Conv-TasNet gLN.  x: (N, C, T); weight, bias: (C, 1)."""
    N, C, T = x.shape
    itemsize = x.dtype.itemsize
    if tile_t is None:
        tile_t = _pick_tile_t(C, T, itemsize)
    use_tiled = (
        tile_t is not None and tile_t < T and tile_t % 128 == 0 and T % tile_t == 0
    )

    if not use_tiled:
        # Whole (C, T) slab per batch element: one HBM read, fused stats + normalize.
        kernel = functools.partial(
            _gln_fused_kernel, eps=float(eps), inv_n=1.0 / float(C * T)
        )
        block_bytes = C * T * itemsize
        return pl.pallas_call(
            kernel,
            out_shape=jax.ShapeDtypeStruct((N, C, T), x.dtype),
            grid_spec=pltpu.PrefetchScalarGridSpec(
                num_scalar_prefetch=0,
                grid=(N,),
                in_specs=[
                    pl.BlockSpec((None, C, T), lambda b: (b, 0, 0)),
                    pl.BlockSpec((C, 1), lambda b: (0, 0)),
                    pl.BlockSpec((C, 1), lambda b: (0, 0)),
                ],
                out_specs=pl.BlockSpec((None, C, T), lambda b: (b, 0, 0)),
            ),
            compiler_params=_mosaic_params(("parallel",), block_bytes, block_bytes),
        )(x, weight, bias)

    # ---- T-tiled reduce-then-normalize path (large slabs / v7x and v5e VMEM budgets) ----
    n_t = T // tile_t
    tile_bytes = C * tile_t * itemsize

    s, ss = pl.pallas_call(
        _gln_stats_kernel,
        out_shape=(
            jax.ShapeDtypeStruct((N, 1, 1), jnp.float32),
            jax.ShapeDtypeStruct((N, 1, 1), jnp.float32),
        ),
        grid_spec=pltpu.PrefetchScalarGridSpec(
            num_scalar_prefetch=0,
            grid=(N, n_t),
            in_specs=[pl.BlockSpec((None, C, tile_t), lambda b, t: (b, 0, t))],
            out_specs=(
                pl.BlockSpec((None, 1, 1), lambda b, t: (b, 0, 0)),
                pl.BlockSpec((None, 1, 1), lambda b, t: (b, 0, 0)),
            ),
        ),
        compiler_params=_mosaic_params(("parallel", "arbitrary"), tile_bytes),
    )(x)

    # O(N*C) scalar / per-channel fold between the two passes (negligible work).
    inv_n = 1.0 / float(C * T)
    mean = s.reshape(N) * inv_n
    var = ss.reshape(N) * inv_n - mean * mean
    inv_std = jax.lax.rsqrt(var + eps)
    scale = weight.astype(jnp.float32)[None, :, :] * inv_std[:, None, None]   # (N, C, 1)
    shift = bias.astype(jnp.float32)[None, :, :] - mean[:, None, None] * scale
    scale = scale.astype(x.dtype)
    shift = shift.astype(x.dtype)

    return pl.pallas_call(
        _gln_apply_kernel,
        out_shape=jax.ShapeDtypeStruct((N, C, T), x.dtype),
        grid_spec=pltpu.PrefetchScalarGridSpec(
            num_scalar_prefetch=0,
            grid=(N, n_t),
            in_specs=[
                pl.BlockSpec((None, C, tile_t), lambda b, t: (b, 0, t)),
                pl.BlockSpec((None, C, 1), lambda b, t: (b, 0, 0)),
                pl.BlockSpec((None, C, 1), lambda b, t: (b, 0, 0)),
            ],
            out_specs=pl.BlockSpec((None, C, tile_t), lambda b, t: (b, 0, t)),
        ),
        compiler_params=_mosaic_params(("parallel", "parallel"), tile_bytes, tile_bytes),
    )(x, scale, shift)


# ----------------------------------------------------------------------------- conv kernels

def _pw_prelu_kernel(x_ref, w_ref, b_ref, a_ref, o_ref):
    # 1x1 conv over channels (MXU) + bias + PReLU for one batch element.
    y = jnp.dot(
        w_ref[...].astype(jnp.float32),
        x_ref[...].astype(jnp.float32),
        preferred_element_type=jnp.float32,
    )
    y = y + b_ref[...].astype(jnp.float32)
    a = a_ref[...].astype(jnp.float32)
    y = jnp.where(y >= 0.0, y, a * y)
    o_ref[...] = y.astype(o_ref.dtype)


def pointwise_conv_prelu(x, w, b, alpha):
    """x: (N, Cin, T); w: (Cout, Cin); b: (Cout,); alpha: PReLU scalar."""
    N, Cin, T = x.shape
    Cout = w.shape[0]
    itemsize = x.dtype.itemsize
    return pl.pallas_call(
        _pw_prelu_kernel,
        out_shape=jax.ShapeDtypeStruct((N, Cout, T), x.dtype),
        grid_spec=pltpu.PrefetchScalarGridSpec(
            num_scalar_prefetch=0,
            grid=(N,),
            in_specs=[
                pl.BlockSpec((None, Cin, T), lambda n: (n, 0, 0)),
                pl.BlockSpec((Cout, Cin), lambda n: (0, 0)),
                pl.BlockSpec((Cout, 1), lambda n: (0, 0)),
                pl.BlockSpec((1, 1), lambda n: (0, 0)),
            ],
            out_specs=pl.BlockSpec((None, Cout, T), lambda n: (n, 0, 0)),
        ),
        compiler_params=_mosaic_params(
            ("parallel",), Cin * T * itemsize, Cout * T * itemsize
        ),
    )(x, w, b.reshape(Cout, 1), jnp.asarray(alpha, jnp.float32).reshape(1, 1))


def _dw_prelu_kernel(xp_ref, w_ref, b_ref, a_ref, o_ref, *, K, dil, t_out):
    # Depthwise conv as K shifted multiply-accumulates along the (lane) time axis.
    xp = xp_ref[...].astype(jnp.float32)      # (C, T + 2*pad)
    w = w_ref[...].astype(jnp.float32)        # (C, K)
    acc = w[:, 0:1] * xp[:, 0:t_out]
    for k in range(1, K):
        acc = acc + w[:, k:k + 1] * xp[:, k * dil:k * dil + t_out]
    acc = acc + b_ref[...].astype(jnp.float32)
    a = a_ref[...].astype(jnp.float32)
    acc = jnp.where(acc >= 0.0, acc, a * acc)
    o_ref[...] = acc.astype(o_ref.dtype)


def depthwise_conv_prelu(x, w, b, alpha, *, kernel_size, dilation, causal):
    """x: (N, C, T); w: (C, K) depthwise taps; b: (C,)."""
    N, C, T = x.shape
    pad = dilation * (kernel_size - 1) if causal else dilation * (kernel_size - 1) // 2
    xp = jnp.pad(x, ((0, 0), (0, 0), (pad, pad)))
    Tp = T + 2 * pad
    t_out = Tp - dilation * (kernel_size - 1)
    itemsize = x.dtype.itemsize
    out = pl.pallas_call(
        functools.partial(_dw_prelu_kernel, K=kernel_size, dil=dilation, t_out=t_out),
        out_shape=jax.ShapeDtypeStruct((N, C, t_out), x.dtype),
        grid_spec=pltpu.PrefetchScalarGridSpec(
            num_scalar_prefetch=0,
            grid=(N,),
            in_specs=[
                pl.BlockSpec((None, C, Tp), lambda n: (n, 0, 0)),
                pl.BlockSpec((C, kernel_size), lambda n: (0, 0)),
                pl.BlockSpec((C, 1), lambda n: (0, 0)),
                pl.BlockSpec((1, 1), lambda n: (0, 0)),
            ],
            out_specs=pl.BlockSpec((None, C, t_out), lambda n: (n, 0, 0)),
        ),
        compiler_params=_mosaic_params(
            ("parallel",), C * Tp * itemsize, C * t_out * itemsize
        ),
    )(xp, w, b.reshape(C, 1), jnp.asarray(alpha, jnp.float32).reshape(1, 1))
    if causal and pad > 0:
        out = out[:, :, :-pad]     # matches PyTorch: c = c[:, :, :-self.pad]
    return out


def _pw_residual_kernel(c_ref, x_ref, w_ref, b_ref, o_ref):
    # 1x1 conv back to in_channels + bias + residual add.
    y = jnp.dot(
        w_ref[...].astype(jnp.float32),
        c_ref[...].astype(jnp.float32),
        preferred_element_type=jnp.float32,
    )
    y = y + b_ref[...].astype(jnp.float32) + x_ref[...].astype(jnp.float32)
    o_ref[...] = y.astype(o_ref.dtype)


def pointwise_conv_residual(c, x, w, b):
    """c: (N, Cout, T); x: (N, Cin, T); w: (Cin, Cout); b: (Cin,)."""
    N, Cout, T = c.shape
    Cin = x.shape[1]
    itemsize = x.dtype.itemsize
    return pl.pallas_call(
        _pw_residual_kernel,
        out_shape=jax.ShapeDtypeStruct((N, Cin, T), x.dtype),
        grid_spec=pltpu.PrefetchScalarGridSpec(
            num_scalar_prefetch=0,
            grid=(N,),
            in_specs=[
                pl.BlockSpec((None, Cout, T), lambda n: (n, 0, 0)),
                pl.BlockSpec((None, Cin, T), lambda n: (n, 0, 0)),
                pl.BlockSpec((Cin, Cout), lambda n: (0, 0)),
                pl.BlockSpec((Cin, 1), lambda n: (0, 0)),
            ],
            out_specs=pl.BlockSpec((None, Cin, T), lambda n: (n, 0, 0)),
        ),
        compiler_params=_mosaic_params(
            ("parallel",), Cout * T * itemsize, 2 * Cin * T * itemsize
        ),
    )(c, x, w, b.reshape(Cin, 1))


# ----------------------------------------------------------------------------- full block

def conv1d_block_forward(x, params, *, kernel_size=3, dilation=1, eps=1e-5, causal=False):
    """Forward of Conv1D_Block (norm='gln', skip_con=False).  x: (N, in_channels, T)."""
    # TODO(synk): skip_con=True branch (extra skip_conv 1x1 output) not implemented.
    c = pointwise_conv_prelu(x, params["w1"], params["b1"], params["alpha1"])
    c = global_layer_norm(c, params["gln1_w"], params["gln1_b"], eps)
    c = depthwise_conv_prelu(
        c, params["wd"], params["bd"], params["alpha2"],
        kernel_size=kernel_size, dilation=dilation, causal=causal,
    )
    c = global_layer_norm(c, params["gln2_w"], params["gln2_b"], eps)
    return pointwise_conv_residual(c, x, params["wsc"], params["bsc"])


# ----------------------------------------------------------------------------- references

def _gln_ref(x, w, b, eps):
    xf = x.astype(jnp.float32)
    mean = jnp.mean(xf, axis=(1, 2), keepdims=True)
    var = jnp.mean((xf - mean) ** 2, axis=(1, 2), keepdims=True)
    y = (w.astype(jnp.float32)[None] * (xf - mean) / jnp.sqrt(var + eps)
         + b.astype(jnp.float32)[None])
    return y.astype(x.dtype)


def _prelu_ref(x, a):
    return jnp.where(x >= 0, x, a * x)


def conv1d_block_ref(x, p, *, kernel_size, dilation, eps, causal):
    hi = jax.lax.Precision.HIGHEST
    c = jnp.einsum("oi,nit->not", p["w1"], x, precision=hi) + p["b1"][None, :, None]
    c = _gln_ref(_prelu_ref(c, p["alpha1"]), p["gln1_w"], p["gln1_b"], eps)
    pad = dilation * (kernel_size - 1) if causal else dilation * (kernel_size - 1) // 2
    cp = jnp.pad(c, ((0, 0), (0, 0), (pad, pad)))
    t_out = cp.shape[-1] - dilation * (kernel_size - 1)
    acc = jnp.zeros((c.shape[0], c.shape[1], t_out), jnp.float32)
    for k in range(kernel_size):
        acc = acc + p["wd"][None, :, k:k + 1] * cp[:, :, k * dilation:k * dilation + t_out]
    acc = acc + p["bd"][None, :, None]
    if causal and pad > 0:
        acc = acc[:, :, :-pad]
    c = _gln_ref(_prelu_ref(acc, p["alpha2"]).astype(x.dtype), p["gln2_w"], p["gln2_b"], eps)
    out = jnp.einsum("oi,nit->not", p["wsc"], c, precision=hi) + p["bsc"][None, :, None] + x
    return out.astype(x.dtype)


# ----------------------------------------------------------------------------- demo / test

if __name__ == "__main__":
    key = jax.random.PRNGKey(0)
    keys = jax.random.split(key, 10)

    # Small shapes consistent with Conv1D_Block: (batch, in_channels, time).
    N, Cin, Cout, T = 2, 16, 32, 128
    K, dilation, eps = 3, 1, 1e-5

    x = jax.random.normal(keys[0], (N, Cin, T), dtype=jnp.float32)
    params = dict(
        w1=0.1 * jax.random.normal(keys[1], (Cout, Cin), jnp.float32),
        b1=0.1 * jax.random.normal(keys[2], (Cout,), jnp.float32),
        alpha1=jnp.float32(0.25),                     # nn.PReLU default init
        gln1_w=jnp.ones((Cout, 1), jnp.float32),      # gLN weight init (ones)
        gln1_b=jnp.zeros((Cout, 1), jnp.float32),     # gLN bias init (zeros)
        wd=0.1 * jax.random.normal(keys[3], (Cout, K), jnp.float32),
        bd=0.1 * jax.random.normal(keys[4], (Cout,), jnp.float32),
        alpha2=jnp.float32(0.25),
        gln2_w=jnp.ones((Cout, 1), jnp.float32),
        gln2_b=jnp.zeros((Cout, 1), jnp.float32),
        wsc=0.1 * jax.random.normal(keys[5], (Cin, Cout), jnp.float32),
        bsc=0.1 * jax.random.normal(keys[6], (Cin,), jnp.float32),
    )

    out = conv1d_block_forward(x, params, kernel_size=K, dilation=dilation, eps=eps, causal=False)
    out = jax.block_until_ready(out)
    ref = conv1d_block_ref(x, params, kernel_size=K, dilation=dilation, eps=eps, causal=False)
    assert out.shape == (N, Cin, T)
    # Loose tolerance only because default MXU matmul precision may differ between the
    # Pallas kernels and the XLA reference; the gLN kernels are checked tightly below.
    assert jnp.allclose(out, ref, atol=5e-2, rtol=5e-2), "Conv1D_Block mismatch vs reference"

    # Fused single-block gLN path (non-128 T), tight tolerance.
    xg = jax.random.normal(keys[7], (2, 32, 80), jnp.float32)
    wg = 1.0 + 0.1 * jax.random.normal(keys[8], (32, 1), jnp.float32)
    bg = 0.1 * jax.random.normal(keys[9], (32, 1), jnp.float32)
    y1 = jax.block_until_ready(global_layer_norm(xg, wg, bg, eps))
    assert jnp.allclose(y1, _gln_ref(xg, wg, bg, eps), atol=1e-4, rtol=1e-4), "gLN (fused) mismatch"

    # T-tiled reduce-then-normalize gLN path (lane-dense 128 tiles), tight tolerance.
    xg2 = jax.random.normal(keys[7], (2, 32, 256), jnp.float32)
    y2 = jax.block_until_ready(global_layer_norm(xg2, wg, bg, eps, tile_t=128))
    assert jnp.allclose(y2, _gln_ref(xg2, wg, bg, eps), atol=1e-4, rtol=1e-4), "gLN (tiled) mismatch"

    print("KERNEL_OK")
</pallas_src>

<mosaic_0001>
module attributes {stable_mosaic.version = 11 : i64} {
  func.func @_pw_prelu_kernel(%arg0: i32, %arg1: memref<1x16x128xf32, #tpu.memory_space<vmem>>, %arg2: memref<32x16xf32, #tpu.memory_space<vmem>>, %arg3: memref<32x1xf32, #tpu.memory_space<vmem>>, %arg4: memref<1x1xf32, #tpu.memory_space<vmem>>, %arg5: memref<1x32x128xf32, #tpu.memory_space<vmem>>) attributes {dimension_semantics = [#tpu.dimension_semantics<parallel>], iteration_bounds = array<i64: 2>, scalar_prefetch = 0 : i64, scratch_operands = 0 : i64, tpu.core_type = #tpu.core_type<tc>, window_params = [{transform_indices = @transform_0, window_bounds = array<i64: 1, 16, 128>}, {pipeline_mode = #tpu.pipeline_mode<synchronous>, transform_indices = @transform_1, window_bounds = array<i64: 32, 16>}, {pipeline_mode = #tpu.pipeline_mode<synchronous>, transform_indices = @transform_2, window_bounds = array<i64: 32, 1>}, {pipeline_mode = #tpu.pipeline_mode<synchronous>, transform_indices = @transform_3, window_bounds = array<i64: 1, 1>}, {transform_indices = @transform_4, window_bounds = array<i64: 1, 32, 128>}]} {
    %c0 = arith.constant 0 : index
    %c0_0 = arith.constant 0 : index
    %0 = vector.load %arg2[%c0, %c0_0] : memref<32x16xf32, #tpu.memory_space<vmem>>, vector<32x16xf32>
    %c0_1 = arith.constant 0 : index
    %c0_2 = arith.constant 0 : index
    %c0_3 = arith.constant 0 : index
    %1 = vector.load %arg1[%c0_1, %c0_2, %c0_3] : memref<1x16x128xf32, #tpu.memory_space<vmem>>, vector<1x16x128xf32>
    %2 = vector.shape_cast %1 : vector<1x16x128xf32> to vector<16x128xf32>
    %cst = arith.constant dense<0.000000e+00> : vector<32x128xf32>
    %3 = tpu.matmul %0, %2, %cst {dimension_numbers = #tpu.dot_dimension_numbers<[1], [0], [0], [1], [0, 0, 1, 1], [], []>} : vector<32x16xf32>, vector<16x128xf32>, vector<32x128xf32> -> vector<32x128xf32>
    %c0_4 = arith.constant 0 : index
    %c0_5 = arith.constant 0 : index
    %4 = vector.load %arg3[%c0_4, %c0_5] : memref<32x1xf32, #tpu.memory_space<vmem>>, vector<32x1xf32>
    %5 = vector.broadcast %4 : vector<32x1xf32> to vector<32x128xf32>
    %6 = arith.addf %3, %5 : vector<32x128xf32>
    %c0_6 = arith.constant 0 : index
    %c0_7 = arith.constant 0 : index
    %7 = vector.load %arg4[%c0_6, %c0_7] : memref<1x1xf32, #tpu.memory_space<vmem>>, vector<1x1xf32>
    %cst_8 = arith.constant 0.000000e+00 : f32
    %8 = vector.broadcast %cst_8 : f32 to vector<32x128xf32>
    %9 = arith.cmpf oge, %6, %8 : vector<32x128xf32>
    %10 = vector.broadcast %7 : vector<1x1xf32> to vector<32x128xf32>
    %11 = arith.mulf %10, %6 : vector<32x128xf32>
    %12 = arith.select %9, %6, %11 : vector<32x128xi1>, vector<32x128xf32>
    %c0_9 = arith.constant 0 : index
    %c0_10 = arith.constant 0 : index
    %c0_11 = arith.constant 0 : index
    %13 = vector.load %arg5[%c0_9, %c0_10, %c0_11] : memref<1x32x128xf32, #tpu.memory_space<vmem>>, vector<1x32x128xf32>
    %14 = vector.shape_cast %13 : vector<1x32x128xf32> to vector<32x128xf32>
    %15 = vector.shape_cast %12 : vector<32x128xf32> to vector<1x32x128xf32>
    tpu.vector_store %arg5[%c0_9, %c0_10, %c0_11], %15 {strides = array<i32>} : memref<1x32x128xf32, #tpu.memory_space<vmem>>, vector<1x32x128xf32>,
    return
  }
  func.func @transform_0(%arg0: i32) -> (i32, i32, i32) {
    %c0_i32 = arith.constant 0 : i32
    %c0_i32_0 = arith.constant 0 : i32
    %c0_i32_1 = arith.constant 0 : i32
    return %arg0, %c0_i32, %c0_i32_0 : i32, i32, i32
  }
  func.func @transform_1(%arg0: i32) -> (i32, i32) {
    %c0_i32 = arith.constant 0 : i32
    %c0_i32_0 = arith.constant 0 : i32
    %c0_i32_1 = arith.constant 0 : i32
    return %c0_i32, %c0_i32_0 : i32, i32
  }
  func.func @transform_2(%arg0: i32) -> (i32, i32) {
    %c0_i32 = arith.constant 0 : i32
    %c0_i32_0 = arith.constant 0 : i32
    %c0_i32_1 = arith.constant 0 : i32
    return %c0_i32, %c0_i32_0 : i32, i32
  }
  func.func @transform_3(%arg0: i32) -> (i32, i32) {
    %c0_i32 = arith.constant 0 : i32
    %c0_i32_0 = arith.constant 0 : i32
    %c0_i32_1 = arith.constant 0 : i32
    return %c0_i32, %c0_i32_0 : i32, i32
  }
  func.func @transform_4(%arg0: i32) -> (i32, i32, i32) {
    %c0_i32 = arith.constant 0 : i32
    %c0_i32_0 = arith.constant 0 : i32
    %c0_i32_1 = arith.constant 0 : i32
    return %arg0, %c0_i32, %c0_i32_0 : i32, i32, i32
  }
}

</mosaic_0001>

<llo_original>
// kernel: tpu_custom_call.1
$region0: #{tpu_custom_call.1}
  #allocation0 [shape = 'u32[]', space=smem, size = 0x4, offset = 0x4, fixed_abs, tag = 'smem constant byte address 0x4 - core index']
  #allocation1 [shape = 'u32[144,128]{1,0:T(1,128)}', space=vmem, size = 0x12000, scoped, tag = 'internal scratch']
  #allocation2 [shape = 'f32[1,1]{1,0:T(1,128)S(1)}', space=vmem, size = 0x200, scoped, tag = 'scoped memory for tpu_custom_call.1']
  %s0 = inlined_call_operand.vmem [shape: f32[2,16,128], index: 0, kind: input, shape index: {}]
  %s1 = inlined_call_operand.vmem [shape: f32[32,16], index: 1, kind: input, shape index: {}]
  %s2 = inlined_call_operand.vmem [shape: f32[32,1], index: 2, kind: input, shape index: {}]
  %s3 = inlined_call_operand.<no memory space> [shape: f32[1,1], index: 3, kind: input, shape index: {}]
  %s4 = inlined_call_operand.hbm [shape: f32[2,32,128], index: 4, kind: output, shape index: {}]
  %s5 = sld [smem:[#allocation0]]
  $region49: #{tpu_custom_call.1} parent=0
    _
  %s7 = ssub.s32 1, %s5
  %s8 = scalar_select 0, %s7, %s5
  %v9 = vstv %s3
  %10 = vst [vmem:[#allocation2] sm:$0x1] %v9
  $region1: #{tpu_custom_call.1} parent=0
    #allocation3 [shape = 'u8[32768]{0}', space=vmem, size = 0x8000, scoped, tag = 'output window, operand 0']
    #allocation4 [shape = 's32[2]{0}', space=sflag, size = 0x8, scoped, tag = 'scoped memory for tpu_custom_call.1']
    %11 = vsyncpa [#allocation4], 0
    %s12 = scalar_lea.sflag [#allocation4], 1
    %13 = vsyncpa %s12, 0
    loop: start=0, step=1, limit=4
    $region2: #{tpu_custom_call.1} parent=1 // loop_pre_header
      _
    $region3: #{tpu_custom_call.1} parent=1 // loop_header
      %s15 = sphi 0, %s19
      %p16 = scmp.ge.s32.totalorder %s15, 4
      %s25 = sphi 0, %s27
      %s28 = sphi 0, %s25
      %s29 = sphi 0, %s28
      %s45 = sphi 0, %s29
      %s49 = sphi 0, %s49
      %s51 = sphi 0, %s49
      %s52 = sphi 0, %s51
      %s66 = sphi 0, %s52
      %s70 = sphi 0, %s70
      %s72 = sphi 0, %s70
      %s73 = sphi 0, %s72
      %s87 = sphi 0, %s73
      %s91 = sphi 0, %s91
      %s93 = sphi 0, %s91
      %s94 = sphi 0, %s93
      %s108 = sphi 0, %s94
      %s114 = sphi 0, %s116
      %s117 = sphi 0, %s114
      %s118 = sphi 0, %s117
      %s134 = sphi 0, %s118
    $region4: #{tpu_custom_call.1} parent=1 // loop_header_branch
      %18 = sbr.rel (%p16) target = $region8
    $region5: #{tpu_custom_call.1} parent=1 // loop_body
      %s20 = ssub.s32 %s15, 1
      %s21 = ssub.s32 %s15, 2
      %s22 = sadd.s32 %s15, 1
      %s23 = ssub.s32 %s15, %s22
      %p24 = scmp.eq.s32.totalorder %s23, 0
      %s26 = sadd.s32 %s25, 1
      %s27 = scalar_select %p24, %s25, %s26
      %p30 = pneg %p24
      %p31 = scmp.eq.s32.totalorder %s15, 1
      %p32 = por %p30, %p31
      %p33 = scmp.ne.s32.totalorder %s25, %s28
      %p34 = scmp.eq.s32.totalorder %s15, 0
      %p35 = por %p33, %p34
      %p36 = scmp.ne.s32.totalorder %s25, %s28
      %p37 = scmp.eq.s32.totalorder %s20, 1
      %p38 = por %p36, %p37
      %p39 = scmp.ne.s32.totalorder %s28, %s29
      %p40 = scmp.eq.s32.totalorder %s20, 0
      %p41 = por %p39, %p40
      %p42 = scmp.ne.s32.totalorder %s28, %s29
      %p43 = scmp.eq.s32.totalorder %s21, 1
      %p44 = por %p42, %p43
      %p46 = scmp.ne.s32.totalorder %s29, %s45
      %p47 = scmp.eq.s32.totalorder %s21, 0
      %p48 = por %p46, %p47
      %s50 = sadd.s32 %s49, 1
      %p53 = scmp.eq.s32.totalorder %s15, 1
      %p54 = scmp.ne.s32.totalorder %s49, %s51
      %p55 = scmp.eq.s32.totalorder %s15, 0
      %p56 = por %p54, %p55
      %p57 = scmp.ne.s32.totalorder %s49, %s51
      %p58 = scmp.eq.s32.totalorder %s20, 1
      %p59 = por %p57, %p58
      %p60 = scmp.ne.s32.totalorder %s51, %s52
      %p61 = scmp.eq.s32.totalorder %s20, 0
      %p62 = por %p60, %p61
      %p63 = scmp.ne.s32.totalorder %s51, %s52
      %p64 = scmp.eq.s32.totalorder %s21, 1
      %p65 = por %p63, %p64
      %p67 = scmp.ne.s32.totalorder %s52, %s66
      %p68 = scmp.eq.s32.totalorder %s21, 0
      %p69 = por %p67, %p68
      %s71 = sadd.s32 %s70, 1
      %p74 = scmp.eq.s32.totalorder %s15, 1
      %p75 = scmp.ne.s32.totalorder %s70, %s72
      %p76 = scmp.eq.s32.totalorder %s15, 0
      %p77 = por %p75, %p76
      %p78 = scmp.ne.s32.totalorder %s70, %s72
      %p79 = scmp.eq.s32.totalorder %s20, 1
      %p80 = por %p78, %p79
      %p81 = scmp.ne.s32.totalorder %s72, %s73
      %p82 = scmp.eq.s32.totalorder %s20, 0
      %p83 = por %p81, %p82
      %p84 = scmp.ne.s32.totalorder %s72, %s73
      %p85 = scmp.eq.s32.totalorder %s21, 1
      %p86 = por %p84, %p85
      %p88 = scmp.ne.s32.totalorder %s73, %s87
      %p89 = scmp.eq.s32.totalorder %s21, 0
      %p90 = por %p88, %p89
      %s92 = sadd.s32 %s91, 1
      %p95 = scmp.eq.s32.totalorder %s15, 1
      %p96 = scmp.ne.s32.totalorder %s91, %s93
      %p97 = scmp.eq.s32.totalorder %s15, 0
      %p98 = por %p96, %p97
      %p99 = scmp.ne.s32.totalorder %s91, %s93
      %p100 = scmp.eq.s32.totalorder %s20, 1
      %p101 = por %p99, %p100
      %p102 = scmp.ne.s32.totalorder %s93, %s94
      %p103 = scmp.eq.s32.totalorder %s20, 0
      %p104 = por %p102, %p103
      %p105 = scmp.ne.s32.totalorder %s93, %s94
      %p106 = scmp.eq.s32.totalorder %s21, 1
      %p107 = por %p105, %p106
      %p109 = scmp.ne.s32.totalorder %s94, %s108
      %p110 = scmp.eq.s32.totalorder %s21, 0
      %p111 = por %p109, %p110
      %s112 = ssub.s32 %s15, %s22
      %p113 = scmp.eq.s32.totalorder %s112, 0
      %s115 = sadd.s32 %s114, 1
      %s116 = scalar_select %p113, %s114, %s115
      %p119 = pneg %p113
      %p120 = scmp.eq.s32.totalorder %s15, 1
      %p121 = por %p119, %p120
      %p122 = scmp.ne.s32.totalorder %s114, %s117
      %p123 = scmp.eq.s32.totalorder %s15, 0
      %p124 = por %p122, %p123
      %p125 = scmp.ne.s32.totalorder %s114, %s117
      %p126 = scmp.eq.s32.totalorder %s20, 1
      %p127 = por %p125, %p126
      %p128 = scmp.ne.s32.totalorder %s117, %s118
      %p129 = scmp.eq.s32.totalorder %s20, 0
      %p130 = por %p128, %p129
      %p131 = scmp.ne.s32.totalorder %s117, %s118
      %p132 = scmp.eq.s32.totalorder %s21, 1
      %p133 = por %p131, %p132
      %p135 = scmp.ne.s32.totalorder %s118, %s134
      %p136 = scmp.eq.s32.totalorder %s21, 0
      %p137 = por %p135, %p136
      %p138 = scmp.le.s32.totalorder 1, %s15
      %p139 = scmp.lt.s32.totalorder %s15, 3
      %p140 = pnand %p138, %p139
      %p141 = pneg %p140
      // Predicated region
      $region9: #{tpu_custom_call.1} parent=5 // pred_check
        _
      $region10: #{tpu_custom_call.1} parent=5 // pred_check_branch
        %143 = sbr.rel (%p140) target = $region12
      $region11: #{tpu_custom_call.1} parent=5 // pred_region
        %s144 = ssub.s32 %s15, 1
        // Predicated region
        $region13: #{tpu_custom_call.1} parent=11 // pred_check
          %p145 = pneg %p62
        $region14: #{tpu_custom_call.1} parent=11 // pred_check_branch
          %147 = sbr.rel (%p145) target = $region16
        $region15: #{tpu_custom_call.1} parent=11 // pred_region
          _
        $region16: #{tpu_custom_call.1} parent=11 // pred_fallthru
          _
        // Predicated region
        $region17: #{tpu_custom_call.1} parent=11 // pred_check
          %p148 = pneg %p83
        $region18: #{tpu_custom_call.1} parent=11 // pred_check_branch
          %150 = sbr.rel (%p148) target = $region20
        $region19: #{tpu_custom_call.1} parent=11 // pred_region
          _
        $region20: #{tpu_custom_call.1} parent=11 // pred_fallthru
          _
        // Predicated region
        $region21: #{tpu_custom_call.1} parent=11 // pred_check
          %p151 = pneg %p104
        $region22: #{tpu_custom_call.1} parent=11 // pred_check_branch
          %153 = sbr.rel (%p151) target = $region24
        $region23: #{tpu_custom_call.1} parent=11 // pred_region
          _
        $region24: #{tpu_custom_call.1} parent=11 // pred_fallthru
          _
      $region12: #{tpu_custom_call.1} parent=5 // pred_fallthru
        _
      %p154 = scmp.lt.s32.totalorder %s15, 2
      // Predicated region
      $region25: #{tpu_custom_call.1} parent=5 // pred_check
        %p155 = pneg %p154
      $region26: #{tpu_custom_call.1} parent=5 // pred_check_branch
        %157 = sbr.rel (%p155) target = $region28
      $region27: #{tpu_custom_call.1} parent=5 // pred_region
        // Predicated region
        $region29: #{tpu_custom_call.1} parent=27 // pred_check
          %p158 = pneg %p35
        $region30: #{tpu_custom_call.1} parent=27 // pred_check_branch
          %160 = sbr.rel (%p158) target = $region32
        $region31: #{tpu_custom_call.1} parent=27 // pred_region
          %p161 = scmp.lt.s32.totalorder %s15, 1
          %s162 = scalar_select %p161, %s15, 1
          %s163 = smul.addr %s162, 2
          %s164 = smul.addr %s163, 8
          %s165 = scalar_lea.vmem %s0, %s164
        $region32: #{tpu_custom_call.1} parent=27 // pred_fallthru
          _
      $region28: #{tpu_custom_call.1} parent=5 // pred_fallthru
        _
      %p166 = scmp.le.s32.totalorder 1, %s15
      %p167 = scmp.lt.s32.totalorder %s15, 3
      %p168 = pnand %p166, %p167
      %p169 = pneg %p168
      // Predicated region
      $region33: #{tpu_custom_call.1} parent=5 // pred_check
        _
      $region34: #{tpu_custom_call.1} parent=5 // pred_check_branch
        %171 = sbr.rel (%p168) target = $region36
      $region35: #{tpu_custom_call.1} parent=5 // pred_region
        %s172 = ssub.s32 %s15, 1
        %p173 = scmp.lt.s32.totalorder %s20, 1
        %s174 = scalar_select %p173, %s20, 1
        %s175 = smul.addr %s174, 2
        %s176 = smul.addr %s175, 8
        %s177 = scalar_lea.vmem %s0, %s176
        %p178 = pneg %p41
        %p179 = pneg %p38
        %p180 = pneg %p62
        %p181 = pneg %p59
        %p182 = pneg %p83
        %p183 = pneg %p80
        %p184 = pneg %p104
        %p185 = pneg %p101
        %p186 = pneg %p130
        %p187 = pneg %p127
        %s188 = sand.u32 %s117, 1
        %s189 = scalar_lea.sflag [#allocation4], %s188
        %s190 = sand.u32 %s117, 1
        %s191 = smul.addr %s190, 32
        %s192 = scalar_lea.vmem [#allocation3], %s191
        %p193 = scmp.lt.s32.totalorder %s20, 1
        %s194 = scalar_select %p193, %s20, 1
        %s195 = smul.addr %s194, 2
        %s196 = smul.addr %s195, 8
        %s197 = scalar_lea.vmem %s0, %s196
        %v198 = vld [vmem:[%s1] sm:$0xff]
        %v199 = vld [vmem:[%s1 + $0x8] sm:$0xff]
        %v200 = vld [vmem:[%s1 + $0x10] sm:$0xff]
        %v201 = vld [vmem:[%s1 + $0x18] sm:$0xff]
        %v202 = vld [vmem:[%s197] sm:$0xff]
        %v203 = vld [vmem:[%s197 + $0x8] sm:$0xff]
        %v204 = vld [vmem:[%s2] sm:$0xff]
        %v205 = vld [vmem:[%s2 + $0x8] sm:$0xff]
        %v206 = vld [vmem:[%s2 + $0x10] sm:$0xff]
        %v207 = vld [vmem:[%s2 + $0x18] sm:$0xff]
        %209 = vset.pattern.permute.xlu0 0
        %210 = vperm.xlu0 %209, %v204
        %v211 = vpop.permute.xlu0 %210
        %214 = vset.pattern.permute.xlu0 0
        %215 = vperm.xlu0 %214, %v205
        %v216 = vpop.permute.xlu0 %215
        %219 = vset.pattern.permute.xlu0 0
        %220 = vperm.xlu0 %219, %v206
        %v221 = vpop.permute.xlu0 %220
        %224 = vset.pattern.permute.xlu0 0
        %225 = vperm.xlu0 %224, %v207
        %v226 = vpop.permute.xlu0 %225
        %vm228 = vcmask 130048
        %v230 = vsel %vm228, %v198, 0
        %v233 = vsel %vm228, %v199, 0
        %v236 = vsel %vm228, %v200, 0
        %v239 = vsel %vm228, %v201, 0
        %241 = vmatprep.subr.mxu0 0.0
        %242 = vmatpush1.msra.mxu0 %v202
        %243 = vmatprep.subr.mxu0 0.0
        %244 = vmatpush1.msra.mxu0 %v203
        %245 = vmatprep.subr.mxu0 0.0
        %246 = vmatpush1.msra.mxu0 0.0
        %247 = vmatprep.subr.mxu0 0.0
        %248 = vmatpush1.msra.mxu0 0.0
        %249 = vmatprep.subr.mxu0 0.0
        %250 = vmatpush1.msra.mxu0 0.0
        %251 = vmatprep.subr.mxu0 0.0
        %252 = vmatpush1.msra.mxu0 0.0
        %253 = vmatprep.subr.mxu0 0.0
        %254 = vmatpush1.msra.mxu0 0.0
        %255 = vmatprep.subr.mxu0 0.0
        %256 = vmatpush1.msra.mxu0 0.0
        %257 = vmatprep.subr.mxu0 0.0
        %258 = vmatpush1.msra.mxu0 0.0
        %259 = vmatprep.subr.mxu0 0.0
        %260 = vmatpush1.msra.mxu0 0.0
        %261 = vmatprep.subr.mxu0 0.0
        %262 = vmatpush1.msra.mxu0 0.0
        %263 = vmatprep.subr.mxu0 0.0
        %264 = vmatpush1.msra.mxu0 0.0
        %265 = vmatprep.subr.mxu0 0.0
        %266 = vmatpush1.msra.mxu0 0.0
        %267 = vmatprep.subr.mxu0 0.0
        %268 = vmatpush1.msra.mxu0 0.0
        %269 = vmatprep.subr.mxu0 0.0
        %270 = vmatpush1.msra.mxu0 0.0
        %271 = vmatprep.subr.mxu0 0.0
        %272 = vmatpush1.msra.mxu0 0.0
        %273 = vmatprep.subr.mxu0 0.0
        %274 = vmatpush1.msra.mxu0 0.0
        %275 = vmatprep.subr.mxu0 0.0
        %276 = vmatpush1.msra.mxu0 0.0
        %277 = vmatprep.subr.mxu0 0.0
        %278 = vmatpush1.msra.mxu0 0.0
        %279 = vmatprep.subr.mxu0 0.0
        %280 = vmatpush1.msra.mxu0 0.0
        %281 = vmatprep.subr.mxu0 0.0
        %282 = vmatpush1.msra.mxu0 0.0
        %283 = vmatprep.subr.mxu0 0.0
        %284 = vmatpush1.msra.mxu0 0.0
        %285 = vmatprep.subr.mxu0 0.0
        %286 = vmatpush1.msra.mxu0 0.0
        %287 = vmatprep.subr.mxu0 0.0
        %288 = vmatpush1.msra.mxu0 0.0
        %289 = vmatprep.subr.mxu0 0.0
        %290 = vmatpush1.msra.mxu0 0.0
        %291 = vmatprep.subr.mxu0 0.0
        %292 = vmatpush1.msra.mxu0 0.0
        %293 = vmatprep.subr.mxu0 0.0
        %294 = vmatpush1.msra.mxu0 0.0
        %295 = vmatprep.subr.mxu0 0.0
        %296 = vmatpush1.msra.mxu0 0.0
        %297 = vmatprep.subr.mxu0 0.0
        %298 = vmatpush1.msra.mxu0 0.0
        %299 = vmatprep.subr.mxu0 0.0
        %300 = vmatpush1.msra.mxu0 0.0
        %301 = vmatprep.subr.mxu0 0.0
        %302 = vmatpush1.msra.mxu0 0.0
        %303 = vmatprep.subr.mxu0 0.0
        %304 = vmatpush1.msra.mxu0 0.0
        %305 = vmatprep.mubr.f32.mxu0 0.0
        %306 = vmatmul.mubr.f32.gmra.mrb[0].mxu0 %v230
        %v307 = vpop.f32.mrb[0].mxu0
        %v308 = vadd.f32 %v211, %v307
        %v309 = vpop.f32.mrb[0].mxu0
        %310 = vmatprep.mubr.f32.mxu0 0.0
        %311 = vmatmul.mubr.f32.gmra.mrb[0].mxu0 %v233
        %v312 = vpop.f32.mrb[0].mxu0
        %v313 = vadd.f32 %v216, %v312
        %v314 = vpop.f32.mrb[0].mxu0
        %315 = vmatprep.mubr.f32.mxu0 0.0
        %316 = vmatmul.mubr.f32.gmra.mrb[0].mxu0 %v236
        %v317 = vpop.f32.mrb[0].mxu0
        %v318 = vadd.f32 %v221, %v317
        %v319 = vpop.f32.mrb[0].mxu0
        %320 = vmatprep.mubr.f32.mxu0 0.0
        %321 = vmatmul.mubr.f32.gmra.mrb[0].mxu0 %v239
        %v322 = vpop.f32.mrb[0].mxu0
        %v323 = vadd.f32 %v226, %v322
        %v324 = vpop.f32.mrb[0].mxu0
        %325 = vdwg.mxu0
        %v326 = vld [vmem:[#allocation2] sm:$0x1]
        %vm327 = vcmp.ge.f32.partialorder %v308, 0.0
        %vm328 = vcmp.ge.f32.partialorder %v313, 0.0
        %vm329 = vcmp.ge.f32.partialorder %v318, 0.0
        %vm330 = vcmp.ge.f32.partialorder %v323, 0.0
        %v332 = vlaneseq
        %v333 = vshrl.u32 %v332, 7
        %v334 = vsub.s32 0, %v333
        %v335 = vrot.slane %v326, %v334
        %336 = vset.pattern.permute.xlu0 0
        %337 = vperm.xlu0 %336, %v335
        %v338 = vpop.permute.xlu0 %337
        %v340 = vmul.f32 %v338, %v308
        %v341 = vmul.f32 %v338, %v313
        %v342 = vmul.f32 %v338, %v318
        %v343 = vmul.f32 %v338, %v323
        %v344 = vsel %vm327, %v308, %v340
        %v345 = vsel %vm328, %v313, %v341
        %v346 = vsel %vm329, %v318, %v342
        %v347 = vsel %vm330, %v323, %v343
        %348 = vst [vmem:[%s192] sm:$0xff] %v344
        %349 = vst [vmem:[%s192 + $0x8] sm:$0xff] %v345
        %350 = vst [vmem:[%s192 + $0x10] sm:$0xff] %v346
        %351 = vst [vmem:[%s192 + $0x18] sm:$0xff] %v347
        %s352 = sand.u32 %s117, 1
        %s353 = scalar_lea.sflag [#allocation4], %s352
        %s354 = sand.u32 %s117, 1
        %s355 = smul.addr %s354, 32
        %s356 = scalar_lea.vmem [#allocation3], %s355
        // Predicated region
        $region37: #{tpu_custom_call.1} parent=35 // pred_check
          %p357 = pneg %p127
        $region38: #{tpu_custom_call.1} parent=35 // pred_check_branch
          %359 = sbr.rel (%p357) target = $region40
        $region39: #{tpu_custom_call.1} parent=35 // pred_region
          %s361 = ssub.s32 512, 512
          %362 = vsyncadd %s353, %s361
          %s363 = smul.addr %s20, 4
          %s364 = smul.addr %s363, 128
          %s365 = scalar_lea.hbm %s4, %s364
          %s366 = sshll.u32 %s356, 4
          %s367 = int_to_ptr.vmem [resolvable:$true] %s366
          %372 = dma.vmem_to_hbm [thread:$0]  %s367, 512, %s365, %s353, 128, 128, 8
        $region40: #{tpu_custom_call.1} parent=35 // pred_fallthru
          _
      $region36: #{tpu_custom_call.1} parent=5 // pred_fallthru
        _
      %p373 = scmp.le.s32.totalorder 2, %s15
      // Predicated region
      $region41: #{tpu_custom_call.1} parent=5 // pred_check
        %p374 = pneg %p373
      $region42: #{tpu_custom_call.1} parent=5 // pred_check_branch
        %376 = sbr.rel (%p374) target = $region44
      $region43: #{tpu_custom_call.1} parent=5 // pred_region
        %s377 = ssub.s32 %s15, 2
        // Predicated region
        $region45: #{tpu_custom_call.1} parent=43 // pred_check
          %p378 = pneg %p133
        $region46: #{tpu_custom_call.1} parent=43 // pred_check_branch
          %380 = sbr.rel (%p378) target = $region48
        $region47: #{tpu_custom_call.1} parent=43 // pred_region
          %s381 = sand.u32 %s118, 1
          %s382 = scalar_lea.sflag [#allocation4], %s381
          %s383 = sand.u32 %s118, 1
          %s384 = smul.addr %s383, 32
          %s385 = scalar_lea.vmem [#allocation3], %s384
          %386 = dma.done %s382, 512
        $region48: #{tpu_custom_call.1} parent=43 // pred_fallthru
          _
      $region44: #{tpu_custom_call.1} parent=5 // pred_fallthru
        _
    $region6: #{tpu_custom_call.1} parent=1 // loop_footer
      %s19 = sadd.s32 1, %s15
    $region7: #{tpu_custom_call.1} parent=1 // loop_footer_branch
      %14 = sbr.rel target = $region3
    $region8: #{tpu_custom_call.1} parent=1 // loop_exit
      _
    %387 = vsyncpa [#allocation4], 1
    %s388 = scalar_lea.sflag [#allocation4], 1
    %389 = vsyncpa %s388, 1

</llo_original>
